<compile_context>
chip_gen: v7x
topology: tpu7x:2x2x1
jax: 0.10.0
libtpu: 0.0.40
codegen_flags: <defaults>
</compile_context>

<pallas_src>
import functools

import jax
import jax.numpy as jnp
from jax.experimental import pallas as pl
from jax.experimental.pallas import tpu as pltpu

NEG_SLOPE = 0.2
BN_EPS = 1e-5
KW = 4
PADW = 1
LANES = 128                        # pad Cout to the vreg lane width -> unmasked stores
MAX_TM = 1024                      # max rows per M tile (double-buffered by the pipeline)
TILE_BYTES = 4 * 1024 * 1024       # cap for one bf16 patch tile buffer
Z_CACHE_BYTES = 16 * 1024 * 1024   # cache the BN conv output in VMEM when it fits
VMEM_LIMIT = 32 * 1024 * 1024      # explicit scoped-VMEM budget (safe on v5e/v6e/v7x)


def _round_up(x, m):
    return (x + m - 1) // m * m


def _choose_tiling(M, K):
    """Pick (tm, Mp): tm multiple of 16 (bf16 sublane packing), one bf16 patch
    tile <= TILE_BYTES, tm <= MAX_TM, minimal row padding."""
    cap = min(MAX_TM, max(16, (TILE_BYTES // (2 * K)) // 16 * 16))
    n_tiles = max(1, -(-M // cap))
    tm = _round_up(-(-M // n_tiles), 16)
    return tm, n_tiles * tm


# ----------------------------- Pallas kernels ------------------------------

def conv_bias_act_kernel(a_ref, w_ref, b_ref, o_ref, *, apply_relu):
    """One M-tile of  y = A @ W + b  (+ optional LeakyReLU(0.2)).

    A:(TM,K) bf16 patches, W:(K,Cp) bf16 (Cp = Cout padded to 128 lanes),
    b:(1,Cp) f32.  bf16 MXU inputs with f32 accumulation; store in o_ref.dtype.
    """
    z = jnp.dot(a_ref[...], w_ref[...], preferred_element_type=jnp.float32)
    z = z + b_ref[...]
    if apply_relu:
        z = jnp.where(z >= 0, z, NEG_SLOPE * z)
    o_ref[...] = z.astype(o_ref.dtype)


def conv_bn_lrelu_kernel(a_ref, w_ref, g_ref, beta_ref, o_ref, sum_ref, sq_ref,
                         *z_cache, m_true, cache_z):
    """Fused conv (no bias) + BatchNorm (batch stats) + LeakyReLU(0.2).

    grid = (phase, m_tile), both sequential ("arbitrary").
      phase 0: tiled matmul, accumulate per-channel sum / sum-sq into (1,Cp) f32
               VMEM scratch; if cache_z, stash the f32 conv output in a
               grid-persistent VMEM scratch.  o_ref is NOT written (its block
               index is constant during phase 0, so no raw activation hits HBM).
      phase 1: normalize with the batch statistics, apply gamma/beta and
               LeakyReLU, write the output once (bf16).  If cache_z the conv
               output comes from VMEM (no second patch pass, no redundant
               matmul); otherwise it is recomputed from a second patch stream.
    Zero-padded patch rows contribute nothing to the statistics (no conv bias);
    mean/var divide by the true row count m_true.
    """
    phase = pl.program_id(0)
    mt = pl.program_id(1)

    @pl.when(jnp.logical_and(phase == 0, mt == 0))
    def _init():
        sum_ref[...] = jnp.zeros_like(sum_ref)
        sq_ref[...] = jnp.zeros_like(sq_ref)

    @pl.when(phase == 0)
    def _stats():
        z = jnp.dot(a_ref[...], w_ref[...], preferred_element_type=jnp.float32)
        sum_ref[...] += jnp.sum(z, axis=0, keepdims=True)
        sq_ref[...] += jnp.sum(z * z, axis=0, keepdims=True)
        if cache_z:
            z_cache[0][mt] = z

    @pl.when(phase == 1)
    def _normalize():
        if cache_z:
            z = z_cache[0][mt]
        else:
            z = jnp.dot(a_ref[...], w_ref[...], preferred_element_type=jnp.float32)
        inv_m = 1.0 / m_true
        mean = sum_ref[...] * inv_m
        # TODO(synk): E[z^2]-E[z]^2 can cancel for large-mean activations; a
        # shifted / two-pass variance would be more robust for trained weights.
        var = jnp.maximum(sq_ref[...] * inv_m - mean * mean, 0.0)
        y = (z - mean) * jax.lax.rsqrt(var + BN_EPS) * g_ref[...] + beta_ref[...]
        o_ref[...] = jnp.where(y >= 0, y, NEG_SLOPE * y).astype(o_ref.dtype)


# --------------------------- pallas_call wrappers ---------------------------

def pallas_conv_bias_act(patches, wmat, bias, apply_relu, tm, out_dtype):
    Mp, K = patches.shape
    Cp = wmat.shape[1]
    n_tiles = Mp // tm
    kernel = functools.partial(conv_bias_act_kernel, apply_relu=apply_relu)
    return pl.pallas_call(
        kernel,
        out_shape=jax.ShapeDtypeStruct((Mp, Cp), out_dtype),
        grid=(n_tiles,),
        in_specs=[
            pl.BlockSpec((tm, K), lambda i: (i, 0)),
            pl.BlockSpec((K, Cp), lambda i: (0, 0)),
            pl.BlockSpec((1, Cp), lambda i: (0, 0)),
        ],
        out_specs=pl.BlockSpec((tm, Cp), lambda i: (i, 0)),
        compiler_params=pltpu.CompilerParams(
            dimension_semantics=("parallel",),   # shards M tiles across TCs on v7x
            vmem_limit_bytes=VMEM_LIMIT),
    )(patches, wmat, bias)


def pallas_conv_bn_lrelu(patches, wmat, gamma, beta, tm, m_true, out_dtype):
    Mp, K = patches.shape
    Cp = wmat.shape[1]
    n_tiles = Mp // tm
    cache_z = Mp * Cp * 4 <= Z_CACHE_BYTES
    kernel = functools.partial(conv_bn_lrelu_kernel, m_true=m_true, cache_z=cache_z)

    scratch = [pltpu.VMEM((1, Cp), jnp.float32), pltpu.VMEM((1, Cp), jnp.float32)]
    if cache_z:
        scratch.append(pltpu.VMEM((n_tiles, tm, Cp), jnp.float32))
        # phase 0: stream tile i; phase 1: stay parked on the last tile so the
        # patches DMA stream is suppressed (conv output comes from VMEM cache).
        a_map = lambda p, i, last=n_tiles - 1: (i * (1 - p) + last * p, 0)
    else:
        a_map = lambda p, i: (i, 0)

    return pl.pallas_call(
        kernel,
        out_shape=jax.ShapeDtypeStruct((Mp, Cp), out_dtype),
        grid=(2, n_tiles),                       # (phase, M-tile)
        in_specs=[
            pl.BlockSpec((tm, K), a_map),
            pl.BlockSpec((K, Cp), lambda p, i: (0, 0)),
            pl.BlockSpec((1, Cp), lambda p, i: (0, 0)),
            pl.BlockSpec((1, Cp), lambda p, i: (0, 0)),
        ],
        # phase 0 parks on output block 0 and never writes it -> no raw-z HBM
        # writeback; phase 1 writes each block exactly once (block 0's revisits
        # are consecutive, so last-write-wins is safe under sequential phases).
        out_specs=pl.BlockSpec((tm, Cp), lambda p, i: (i * p, 0)),
        scratch_shapes=scratch,
        compiler_params=pltpu.CompilerParams(
            # phase ordering + cross-tile stat reduction -> sequential axes.
            # TODO(synk): a per-core partial-stats path would let v7x's second
            # TensorCore help on the BN layers.
            dimension_semantics=("arbitrary", "arbitrary"),
            vmem_limit_bytes=VMEM_LIMIT),
    )(patches, wmat, gamma, beta)


# -------------------------------- JAX glue ----------------------------------

def im2col(x_nhwc, kh, kw, stride, pad):
    """x:(N,H,W,C) -> patches (N*OH*OW, kh*kw*C) in (kh,kw,C) feature order."""
    N, H, W, C = x_nhwc.shape
    xp = jnp.pad(x_nhwc, ((0, 0), (pad, pad), (pad, pad), (0, 0)))
    OH = (H + 2 * pad - kh) // stride + 1
    OW = (W + 2 * pad - kw) // stride + 1
    cols = []
    for i in range(kh):
        for j in range(kw):
            cols.append(
                xp[:, i:i + (OH - 1) * stride + 1:stride,
                      j:j + (OW - 1) * stride + 1:stride, :])
    p = jnp.stack(cols, axis=3)  # (N, OH, OW, kh*kw, C)
    return p.reshape(N * OH * OW, kh * kw * C), OH, OW


def _conv_layer(x_nhwc, p):
    """One discriminator layer via the fused Pallas kernels."""
    N = x_nhwc.shape[0]
    patches, OH, OW = im2col(x_nhwc, KW, KW, p["stride"], PADW)
    M, K = patches.shape
    cout = p["w"].shape[0]

    tm, Mp = _choose_tiling(M, K)
    if Mp != M:
        patches = jnp.pad(patches, ((0, Mp - M), (0, 0)))
    patches = patches.astype(jnp.bfloat16)   # no-op for intermediate layers

    # OIHW -> (KH,KW,Cin,Cout) -> (K, Cout), pad Cout -> 128 lanes, cast to bf16.
    Cp = _round_up(cout, LANES)
    wmat = jnp.transpose(p["w"], (2, 3, 1, 0)).reshape(K, cout)
    wmat = jnp.pad(wmat, ((0, 0), (0, Cp - cout))).astype(jnp.bfloat16)

    # Intermediate activations in bf16 (next layer's MXU inputs are bf16 anyway);
    # the final (no-ReLU) layer output stays f32.
    out_dtype = jnp.bfloat16 if p["relu"] else jnp.float32

    if p["use_bn"]:
        gamma = jnp.pad(p["gamma"], (0, Cp - cout), constant_values=1.0).reshape(1, Cp)
        beta = jnp.pad(p["beta"], (0, Cp - cout)).reshape(1, Cp)
        y = pallas_conv_bn_lrelu(patches, wmat, gamma, beta, tm, float(M), out_dtype)
    else:
        bias = jnp.pad(p["b"], (0, Cp - cout)).reshape(1, Cp)
        y = pallas_conv_bias_act(patches, wmat, bias, p["relu"], tm, out_dtype)

    return y[:M, :cout].reshape(N, OH, OW, cout)


def discriminator_forward(x_nchw, params):
    x = jnp.transpose(x_nchw, (0, 2, 3, 1)).astype(jnp.bfloat16)  # NCHW -> NHWC
    for p in params:
        x = _conv_layer(x, p)
    return jnp.transpose(x, (0, 3, 1, 2)).astype(jnp.float32)     # back to NCHW


def init_params(key, input_nc=3, ndf=8, n_layers=3):
    """Deterministic synthetic parameters matching the PyTorch module's shapes."""
    defs = []  # (cin, cout, stride, use_bias, use_bn, relu)
    defs.append((input_nc, ndf, 2, True, False, True))
    nf_mult = 1
    for n in range(1, n_layers):
        nf_prev, nf_mult = nf_mult, min(2 ** n, 8)
        defs.append((ndf * nf_prev, ndf * nf_mult, 2, False, True, True))
    nf_prev, nf_mult = nf_mult, min(2 ** n_layers, 8)
    defs.append((ndf * nf_prev, ndf * nf_mult, 1, False, True, True))
    defs.append((ndf * nf_mult, 1, 1, True, False, False))

    params = []
    for (cin, cout, stride, use_bias, use_bn, relu) in defs:
        key, wk, bk = jax.random.split(key, 3)
        w = jax.random.normal(wk, (cout, cin, KW, KW), jnp.float32) * 0.05
        if use_bias:
            b = jax.random.normal(bk, (cout,), jnp.float32) * 0.05
        else:
            b = jnp.zeros((cout,), jnp.float32)
        params.append(dict(
            w=w, b=b,
            gamma=jnp.ones((cout,), jnp.float32),
            beta=jnp.zeros((cout,), jnp.float32),
            stride=stride, use_bn=use_bn, relu=relu))
    return params


def reference_forward(x_nchw, params, low_precision=False):
    """Pure-JAX reference (lax.conv) mirroring PyTorch semantics.

    low_precision=True applies the same bf16-input / f32-accumulate quantization
    as the Pallas kernels (for a tight numerical check of the kernel math).
    """
    x = x_nchw
    for p in params:
        if low_precision:
            xi = x.astype(jnp.bfloat16)
            wi = p["w"].astype(jnp.bfloat16)
        else:
            xi, wi = x, p["w"]
        y = jax.lax.conv_general_dilated(
            xi, wi, (p["stride"], p["stride"]), ((PADW, PADW), (PADW, PADW)),
            dimension_numbers=("NCHW", "OIHW", "NCHW"),
            preferred_element_type=jnp.float32)
        y = y + p["b"].reshape(1, -1, 1, 1)
        if p["use_bn"]:
            mean = jnp.mean(y, axis=(0, 2, 3), keepdims=True)
            var = jnp.mean((y - mean) ** 2, axis=(0, 2, 3), keepdims=True)
            y = (y - mean) * jax.lax.rsqrt(var + BN_EPS)
            y = y * p["gamma"].reshape(1, -1, 1, 1) + p["beta"].reshape(1, -1, 1, 1)
        if p["relu"]:
            y = jnp.where(y >= 0, y, NEG_SLOPE * y)
        x = y
    return x


if __name__ == "__main__":
    key = jax.random.PRNGKey(0)
    key, xk, pk = jax.random.split(key, 3)

    # Small but valid shapes: spatial 32 -> 16 -> 8 -> 4 -> 3 -> 2 patch map.
    x = jax.random.normal(xk, (2, 3, 32, 32), jnp.float32)
    params = init_params(pk, input_nc=3, ndf=8, n_layers=3)

    out = discriminator_forward(x, params)
    out = jax.block_until_ready(out)

    ref_bf16 = reference_forward(x, params, low_precision=True)   # same quantization
    ref_f32 = reference_forward(x, params, low_precision=False)   # PyTorch f32 math

    assert out.shape == ref_f32.shape == (2, 1, 2, 2), (out.shape, ref_f32.shape)

    # Tight check against the quantization-matched reference (kernel math).
    assert jnp.allclose(out, ref_bf16, atol=2e-3, rtol=2e-3), float(
        jnp.max(jnp.abs(out - ref_bf16)))

    # Loose sanity check against full-f32 math (bf16 MXU inputs dominate the gap).
    rel_l2 = jnp.linalg.norm(out - ref_f32) / (jnp.linalg.norm(ref_f32) + 1e-12)
    assert float(rel_l2) < 8e-2, float(rel_l2)

    print("KERNEL_OK")
</pallas_src>

<mosaic_0001>
module attributes {stable_mosaic.version = 11 : i64} {
  func.func @conv_bias_act_kernel(%arg0: i32, %arg1: memref<512x48xbf16, #tpu.memory_space<vmem>>, %arg2: memref<48x128xbf16, #tpu.memory_space<vmem>>, %arg3: memref<1x128xf32, #tpu.memory_space<vmem>>, %arg4: memref<512x128xbf16, #tpu.memory_space<vmem>>) attributes {dimension_semantics = [#tpu.dimension_semantics<parallel>], iteration_bounds = array<i64: 1>, scalar_prefetch = 0 : i64, scratch_operands = 0 : i64, tpu.core_type = #tpu.core_type<tc>, window_params = [{transform_indices = @transform_0, window_bounds = array<i64: 512, 48>}, {pipeline_mode = #tpu.pipeline_mode<synchronous>, transform_indices = @transform_1, window_bounds = array<i64: 48, 128>}, {pipeline_mode = #tpu.pipeline_mode<synchronous>, transform_indices = @transform_2, window_bounds = array<i64: 1, 128>}, {transform_indices = @transform_3, window_bounds = array<i64: 512, 128>}]} {
    %c0 = arith.constant 0 : index
    %c0_0 = arith.constant 0 : index
    %0 = vector.load %arg1[%c0, %c0_0] : memref<512x48xbf16, #tpu.memory_space<vmem>>, vector<512x48xbf16>
    %c0_1 = arith.constant 0 : index
    %c0_2 = arith.constant 0 : index
    %1 = vector.load %arg2[%c0_1, %c0_2] : memref<48x128xbf16, #tpu.memory_space<vmem>>, vector<48x128xbf16>
    %cst = arith.constant dense<0.000000e+00> : vector<512x128xf32>
    %2 = tpu.matmul %0, %1, %cst {dimension_numbers = #tpu.dot_dimension_numbers<[1], [0], [0], [1], [0, 0, 1, 1], [], []>} : vector<512x48xbf16>, vector<48x128xbf16>, vector<512x128xf32> -> vector<512x128xf32>
    %c0_3 = arith.constant 0 : index
    %c0_4 = arith.constant 0 : index
    %3 = vector.load %arg3[%c0_3, %c0_4] : memref<1x128xf32, #tpu.memory_space<vmem>>, vector<1x128xf32>
    %4 = vector.broadcast %3 : vector<1x128xf32> to vector<512x128xf32>
    %5 = arith.addf %2, %4 : vector<512x128xf32>
    %cst_5 = arith.constant 0.000000e+00 : f32
    %6 = vector.broadcast %cst_5 : f32 to vector<512x128xf32>
    %7 = arith.cmpf oge, %5, %6 : vector<512x128xf32>
    %cst_6 = arith.constant 2.000000e-01 : f32
    %8 = vector.broadcast %cst_6 : f32 to vector<512x128xf32>
    %9 = arith.mulf %8, %5 : vector<512x128xf32>
    %10 = arith.select %7, %5, %9 : vector<512x128xi1>, vector<512x128xf32>
    %11 = arith.truncf %10 : vector<512x128xf32> to vector<512x128xbf16>
    %c0_7 = arith.constant 0 : index
    %c0_8 = arith.constant 0 : index
    %12 = vector.load %arg4[%c0_7, %c0_8] : memref<512x128xbf16, #tpu.memory_space<vmem>>, vector<512x128xbf16>
    tpu.vector_store %arg4[%c0_7, %c0_8], %11 {strides = array<i32>} : memref<512x128xbf16, #tpu.memory_space<vmem>>, vector<512x128xbf16>,
    return
  }
  func.func @transform_0(%arg0: i32) -> (i32, i32) {
    %c0_i32 = arith.constant 0 : i32
    %c0_i32_0 = arith.constant 0 : i32
    return %arg0, %c0_i32 : i32, i32
  }
  func.func @transform_1(%arg0: i32) -> (i32, i32) {
    %c0_i32 = arith.constant 0 : i32
    %c0_i32_0 = arith.constant 0 : i32
    %c0_i32_1 = arith.constant 0 : i32
    return %c0_i32, %c0_i32_0 : i32, i32
  }
  func.func @transform_2(%arg0: i32) -> (i32, i32) {
    %c0_i32 = arith.constant 0 : i32
    %c0_i32_0 = arith.constant 0 : i32
    %c0_i32_1 = arith.constant 0 : i32
    return %c0_i32, %c0_i32_0 : i32, i32
  }
  func.func @transform_3(%arg0: i32) -> (i32, i32) {
    %c0_i32 = arith.constant 0 : i32
    %c0_i32_0 = arith.constant 0 : i32
    return %arg0, %c0_i32 : i32, i32
  }
}

</mosaic_0001>

<llo_original>
// kernel: tpu_custom_call.1
$region0: #{tpu_custom_call.1}
  #allocation0 [shape = 'u32[]', space=smem, size = 0x4, offset = 0x4, fixed_abs, tag = 'smem constant byte address 0x4 - core index']
  #allocation1 [shape = 'u32[144,128]{1,0:T(1,128)}', space=vmem, size = 0x12000, scoped, tag = 'internal scratch']
  %s0 = inlined_call_operand.vmem [shape: bf16[512,48], index: 0, kind: input, shape index: {}]
  %s1 = inlined_call_operand.vmem [shape: bf16[48,128], index: 1, kind: input, shape index: {}]
  %s2 = inlined_call_operand.vmem [shape: f32[1,128], index: 2, kind: input, shape index: {}]
  %s3 = inlined_call_operand.hbm [shape: bf16[512,128], index: 3, kind: output, shape index: {}]
  %s4 = sld [smem:[#allocation0]]
  $region22: #{tpu_custom_call.1} parent=0
    _
  %s6 = ssub.s32 1, %s4
  %s7 = scalar_select 0, %s6, %s4
  $region1: #{tpu_custom_call.1} parent=0
    #allocation2 [shape = 'u8[131072]{0}', space=vmem, size = 0x20000, scoped, tag = 'output window, operand 0, single buffered']
    #allocation3 [shape = 's32[1]{0}', space=sflag, size = 0x4, scoped, tag = 'scoped memory for tpu_custom_call.1']
    %8 = vsyncpa [#allocation3], 0
    // Predicated region
    $region2: #{tpu_custom_call.1} parent=1 // pred_check
      _
    $region3: #{tpu_custom_call.1} parent=1 // pred_check_branch
      %10 = sbr.rel (0) target = $region5
    $region4: #{tpu_custom_call.1} parent=1 // pred_region
      _
    $region5: #{tpu_custom_call.1} parent=1 // pred_fallthru
      _
    // Predicated region
    $region6: #{tpu_custom_call.1} parent=1 // pred_check
      _
    $region7: #{tpu_custom_call.1} parent=1 // pred_check_branch
      %12 = sbr.rel (0) target = $region9
    $region8: #{tpu_custom_call.1} parent=1 // pred_region
      _
    $region9: #{tpu_custom_call.1} parent=1 // pred_fallthru
      _
    // Predicated region
    $region10: #{tpu_custom_call.1} parent=1 // pred_check
      _
    $region11: #{tpu_custom_call.1} parent=1 // pred_check_branch
      %14 = sbr.rel (0) target = $region13
    $region12: #{tpu_custom_call.1} parent=1 // pred_region
      _
    $region13: #{tpu_custom_call.1} parent=1 // pred_fallthru
      _
    %v16 = vld [vmem:[%s0] sm:$0xf]
    %v17 = vld [vmem:[%s0 + $0x4] sm:$0xf]
    %v18 = vld [vmem:[%s0 + $0x8] sm:$0xf]
    %v19 = vld [vmem:[%s0 + $0xc] sm:$0xf]
    %v20 = vld [vmem:[%s0 + $0x10] sm:$0xf]
    %v21 = vld [vmem:[%s0 + $0x14] sm:$0xf]
    %v22 = vld [vmem:[%s0 + $0x18] sm:$0xf]
    %v23 = vld [vmem:[%s0 + $0x1c] sm:$0xf]
    %v24 = vld [vmem:[%s0 + $0x20] sm:$0xf]
    %v25 = vld [vmem:[%s0 + $0x24] sm:$0xf]
    %v26 = vld [vmem:[%s0 + $0x28] sm:$0xf]
    %v27 = vld [vmem:[%s0 + $0x2c] sm:$0xf]
    %v28 = vld [vmem:[%s0 + $0x30] sm:$0xf]
    %v29 = vld [vmem:[%s0 + $0x34] sm:$0xf]
    %v30 = vld [vmem:[%s0 + $0x38] sm:$0xf]
    %v31 = vld [vmem:[%s0 + $0x3c] sm:$0xf]
    %v32 = vld [vmem:[%s0 + $0x40] sm:$0xf]
    %v33 = vld [vmem:[%s0 + $0x44] sm:$0xf]
    %v34 = vld [vmem:[%s0 + $0x48] sm:$0xf]
    %v35 = vld [vmem:[%s0 + $0x4c] sm:$0xf]
    %v36 = vld [vmem:[%s0 + $0x50] sm:$0xf]
    %v37 = vld [vmem:[%s0 + $0x54] sm:$0xf]
    %v38 = vld [vmem:[%s0 + $0x58] sm:$0xf]
    %v39 = vld [vmem:[%s0 + $0x5c] sm:$0xf]
    %v40 = vld [vmem:[%s0 + $0x60] sm:$0xf]
    %v41 = vld [vmem:[%s0 + $0x64] sm:$0xf]
    %v42 = vld [vmem:[%s0 + $0x68] sm:$0xf]
    %v43 = vld [vmem:[%s0 + $0x6c] sm:$0xf]
    %v44 = vld [vmem:[%s0 + $0x70] sm:$0xf]
    %v45 = vld [vmem:[%s0 + $0x74] sm:$0xf]
    %v46 = vld [vmem:[%s0 + $0x78] sm:$0xf]
    %v47 = vld [vmem:[%s0 + $0x7c] sm:$0xf]
    %v48 = vld [vmem:[%s0 + $0x80] sm:$0xf]
    %v49 = vld [vmem:[%s0 + $0x84] sm:$0xf]
    %v50 = vld [vmem:[%s0 + $0x88] sm:$0xf]
    %v51 = vld [vmem:[%s0 + $0x8c] sm:$0xf]
    %v52 = vld [vmem:[%s0 + $0x90] sm:$0xf]
    %v53 = vld [vmem:[%s0 + $0x94] sm:$0xf]
    %v54 = vld [vmem:[%s0 + $0x98] sm:$0xf]
    %v55 = vld [vmem:[%s0 + $0x9c] sm:$0xf]
    %v56 = vld [vmem:[%s0 + $0xa0] sm:$0xf]
    %v57 = vld [vmem:[%s0 + $0xa4] sm:$0xf]
    %v58 = vld [vmem:[%s0 + $0xa8] sm:$0xf]
    %v59 = vld [vmem:[%s0 + $0xac] sm:$0xf]
    %v60 = vld [vmem:[%s0 + $0xb0] sm:$0xf]
    %v61 = vld [vmem:[%s0 + $0xb4] sm:$0xf]
    %v62 = vld [vmem:[%s0 + $0xb8] sm:$0xf]
    %v63 = vld [vmem:[%s0 + $0xbc] sm:$0xf]
    %v64 = vld [vmem:[%s0 + $0xc0] sm:$0xf]
    %v65 = vld [vmem:[%s0 + $0xc4] sm:$0xf]
    %v66 = vld [vmem:[%s0 + $0xc8] sm:$0xf]
    %v67 = vld [vmem:[%s0 + $0xcc] sm:$0xf]
    %v68 = vld [vmem:[%s0 + $0xd0] sm:$0xf]
    %v69 = vld [vmem:[%s0 + $0xd4] sm:$0xf]
    %v70 = vld [vmem:[%s0 + $0xd8] sm:$0xf]
    %v71 = vld [vmem:[%s0 + $0xdc] sm:$0xf]
    %v72 = vld [vmem:[%s0 + $0xe0] sm:$0xf]
    %v73 = vld [vmem:[%s0 + $0xe4] sm:$0xf]
    %v74 = vld [vmem:[%s0 + $0xe8] sm:$0xf]
    %v75 = vld [vmem:[%s0 + $0xec] sm:$0xf]
    %v76 = vld [vmem:[%s0 + $0xf0] sm:$0xf]
    %v77 = vld [vmem:[%s0 + $0xf4] sm:$0xf]
    %v78 = vld [vmem:[%s0 + $0xf8] sm:$0xf]
    %v79 = vld [vmem:[%s0 + $0xfc] sm:$0xf]
    %v80 = vld [vmem:[%s1] sm:$0xf]
    %v81 = vld [vmem:[%s1 + $0x4] sm:$0xf]
    %v82 = vld [vmem:[%s1 + $0x8] sm:$0xf]
    %v83 = vld [vmem:[%s1 + $0xc] sm:$0xf]
    %v84 = vld [vmem:[%s1 + $0x10] sm:$0xf]
    %v85 = vld [vmem:[%s1 + $0x14] sm:$0xf]
    %v86 = vld [vmem:[%s2] sm:$0x1]
    %v88 = vlaneseq
    %v89 = vshrl.u32 %v88, 7
    %v90 = vsub.s32 0, %v89
    %v91 = vrot.slane %v86, %v90
    %v157 = vunpack.c.l.b16 %v16
    %v158 = vunpack.c.l.b16 %v17
    %v159 = vunpack.c.l.b16 %v18
    %v160 = vunpack.c.l.b16 %v19
    %v161 = vunpack.c.l.b16 %v20
    %v162 = vunpack.c.l.b16 %v21
    %v163 = vunpack.c.l.b16 %v22
    %v164 = vunpack.c.l.b16 %v23
    %v165 = vunpack.c.l.b16 %v24
    %v166 = vunpack.c.l.b16 %v25
    %v167 = vunpack.c.l.b16 %v26
    %v168 = vunpack.c.l.b16 %v27
    %v169 = vunpack.c.l.b16 %v28
    %v170 = vunpack.c.l.b16 %v29
    %v171 = vunpack.c.l.b16 %v30
    %v172 = vunpack.c.l.b16 %v31
    %v173 = vunpack.c.l.b16 %v32
    %v174 = vunpack.c.l.b16 %v33
    %v175 = vunpack.c.l.b16 %v34
    %v176 = vunpack.c.l.b16 %v35
    %v177 = vunpack.c.l.b16 %v36
    %v178 = vunpack.c.l.b16 %v37
    %v179 = vunpack.c.l.b16 %v38
    %v180 = vunpack.c.l.b16 %v39
    %v181 = vunpack.c.l.b16 %v40
    %v182 = vunpack.c.l.b16 %v41
    %v183 = vunpack.c.l.b16 %v42
    %v184 = vunpack.c.l.b16 %v43
    %v185 = vunpack.c.l.b16 %v44
    %v186 = vunpack.c.l.b16 %v45
    %v187 = vunpack.c.l.b16 %v46
    %v188 = vunpack.c.l.b16 %v47
    %v189 = vunpack.c.l.b16 %v48
    %v190 = vunpack.c.l.b16 %v49
    %v191 = vunpack.c.l.b16 %v50
    %v192 = vunpack.c.l.b16 %v51
    %v193 = vunpack.c.l.b16 %v52
    %v194 = vunpack.c.l.b16 %v53
    %v195 = vunpack.c.l.b16 %v54
    %v196 = vunpack.c.l.b16 %v55
    %v197 = vunpack.c.l.b16 %v56
    %v198 = vunpack.c.l.b16 %v57
    %v199 = vunpack.c.l.b16 %v58
    %v200 = vunpack.c.l.b16 %v59
    %v201 = vunpack.c.l.b16 %v60
    %v202 = vunpack.c.l.b16 %v61
    %v203 = vunpack.c.l.b16 %v62
    %v204 = vunpack.c.l.b16 %v63
    %v205 = vunpack.c.l.b16 %v64
    %v206 = vunpack.c.l.b16 %v65
    %v207 = vunpack.c.l.b16 %v66
    %v208 = vunpack.c.l.b16 %v67
    %v209 = vunpack.c.l.b16 %v68
    %v210 = vunpack.c.l.b16 %v69
    %v211 = vunpack.c.l.b16 %v70
    %v212 = vunpack.c.l.b16 %v71
    %v213 = vunpack.c.l.b16 %v72
    %v214 = vunpack.c.l.b16 %v73
    %v215 = vunpack.c.l.b16 %v74
    %v216 = vunpack.c.l.b16 %v75
    %v217 = vunpack.c.l.b16 %v76
    %v218 = vunpack.c.l.b16 %v77
    %v219 = vunpack.c.l.b16 %v78
    %v220 = vunpack.c.l.b16 %v79
    %v221 = vpack.c.b16 %v158, %v157
    %v222 = vpack.c.b16 %v160, %v159
    %v223 = vpack.c.b16 %v162, %v161
    %v224 = vpack.c.b16 %v164, %v163
    %v225 = vpack.c.b16 %v166, %v165
    %v226 = vpack.c.b16 %v168, %v167
    %v227 = vpack.c.b16 %v170, %v169
    %v228 = vpack.c.b16 %v172, %v171
    %v229 = vpack.c.b16 %v174, %v173
    %v230 = vpack.c.b16 %v176, %v175
    %v231 = vpack.c.b16 %v178, %v177
    %v232 = vpack.c.b16 %v180, %v179
    %v233 = vpack.c.b16 %v182, %v181
    %v234 = vpack.c.b16 %v184, %v183
    %v235 = vpack.c.b16 %v186, %v185
    %v236 = vpack.c.b16 %v188, %v187
    %v237 = vpack.c.b16 %v190, %v189
    %v238 = vpack.c.b16 %v192, %v191
    %v239 = vpack.c.b16 %v194, %v193
    %v240 = vpack.c.b16 %v196, %v195
    %v241 = vpack.c.b16 %v198, %v197
    %v242 = vpack.c.b16 %v200, %v199
    %v243 = vpack.c.b16 %v202, %v201
    %v244 = vpack.c.b16 %v204, %v203
    %v245 = vpack.c.b16 %v206, %v205
    %v246 = vpack.c.b16 %v208, %v207
    %v247 = vpack.c.b16 %v210, %v209
    %v248 = vpack.c.b16 %v212, %v211
    %v249 = vpack.c.b16 %v214, %v213
    %v250 = vpack.c.b16 %v216, %v215
    %v251 = vpack.c.b16 %v218, %v217
    %v252 = vpack.c.b16 %v220, %v219
    %v259 = vunpack.c.l.b16 %v80
    %v260 = vunpack.c.l.b16 %v81
    %v261 = vunpack.c.l.b16 %v82
    %v262 = vunpack.c.l.b16 %v83
    %v263 = vunpack.c.l.b16 %v84
    %v264 = vunpack.c.l.b16 %v85
    %v265 = vpack.c.b16 %v260, %v259
    %v266 = vpack.c.b16 %v262, %v261
    %v267 = vpack.c.b16 %v264, %v263
    %vm271 = vcmask 392192
    %v273 = vsel %vm271, %v221, 0
    %v276 = vsel %vm271, %v222, 0
    %v279 = vsel %vm271, %v223, 0
    %v282 = vsel %vm271, %v224, 0
    %v285 = vsel %vm271, %v225, 0
    %v288 = vsel %vm271, %v226, 0
    %v291 = vsel %vm271, %v227, 0
    %v294 = vsel %vm271, %v228, 0
    %v297 = vsel %vm271, %v229, 0
    %v300 = vsel %vm271, %v230, 0
    %v303 = vsel %vm271, %v231, 0
    %v306 = vsel %vm271, %v232, 0
    %v309 = vsel %vm271, %v233, 0
    %v312 = vsel %vm271, %v234, 0
    %v315 = vsel %vm271, %v235, 0
    %v318 = vsel %vm271, %v236, 0
    %v321 = vsel %vm271, %v237, 0
    %v324 = vsel %vm271, %v238, 0
    %v327 = vsel %vm271, %v239, 0
    %v330 = vsel %vm271, %v240, 0
    %v333 = vsel %vm271, %v241, 0
    %v336 = vsel %vm271, %v242, 0
    %v339 = vsel %vm271, %v243, 0
    %v342 = vsel %vm271, %v244, 0
    %v345 = vsel %vm271, %v245, 0
    %v348 = vsel %vm271, %v246, 0
    %v351 = vsel %vm271, %v247, 0
    %v354 = vsel %vm271, %v248, 0
    %v357 = vsel %vm271, %v249, 0
    %v360 = vsel %vm271, %v250, 0
    %v363 = vsel %vm271, %v251, 0
    %v366 = vsel %vm271, %v252, 0
    %368 = vmatprep.subr.bf16.mxu0 0
    %369 = vmatpush1.bf16.msra.mxu0 %v265
    %370 = vmatprep.subr.bf16.mxu0 0
    %371 = vmatpush1.bf16.msra.mxu0 %v266
    %372 = vmatprep.subr.bf16.mxu0 0
    %373 = vmatpush1.bf16.msra.mxu0 %v267
    %374 = vmatprep.subr.bf16.mxu0 0
    %375 = vmatpush1.bf16.msra.mxu0 0
    %376 = vmatprep.subr.bf16.mxu0 0
    %377 = vmatpush1.bf16.msra.mxu0 0
    %378 = vmatprep.subr.bf16.mxu0 0
    %379 = vmatpush1.bf16.msra.mxu0 0
    %380 = vmatprep.subr.bf16.mxu0 0
    %381 = vmatpush1.bf16.msra.mxu0 0
    %382 = vmatprep.subr.bf16.mxu0 0
    %383 = vmatpush1.bf16.msra.mxu0 0
    %384 = vmatprep.subr.bf16.mxu0 0
    %385 = vmatpush1.bf16.msra.mxu0 0
    %386 = vmatprep.subr.bf16.mxu0 0
    %387 = vmatpush1.bf16.msra.mxu0 0
    %388 = vmatprep.subr.bf16.mxu0 0
    %389 = vmatpush1.bf16.msra.mxu0 0
    %390 = vmatprep.subr.bf16.mxu0 0
    %391 = vmatpush1.bf16.msra.mxu0 0
    %392 = vmatprep.subr.bf16.mxu0 0
    %393 = vmatpush1.bf16.msra.mxu0 0
    %394 = vmatprep.subr.bf16.mxu0 0
    %395 = vmatpush1.bf16.msra.mxu0 0
    %396 = vmatprep.subr.bf16.mxu0 0
    %397 = vmatpush1.bf16.msra.mxu0 0
    %398 = vmatprep.subr.bf16.mxu0 0
    %399 = vmatpush1.bf16.msra.mxu0 0
    %400 = vmatprep.mubr.bf16.mxu0 0
    %401 = vmatmul.mubr.bf16.gmra.mrb[0].mxu0 %v273
    %v402 = vpop.f32.mrb[0].mxu0
    %v403 = vadd.f32 %v91, %v402
    %v404 = vpop.f32.mrb[0].mxu0
    %v405 = vpop.f32.mrb[0].mxu0
    %v406 = vadd.f32 %v91, %v405
    %v407 = vpop.f32.mrb[0].mxu0
    %408 = vmatprep.mubr.bf16.mxu0 0
    %409 = vmatmul.mubr.bf16.gmra.mrb[0].mxu0 %v276
    %v410 = vpop.f32.mrb[0].mxu0
    %v411 = vadd.f32 %v91, %v410
    %v412 = vpop.f32.mrb[0].mxu0
    %v413 = vpop.f32.mrb[0].mxu0
    %v414 = vadd.f32 %v91, %v413
    %v415 = vpop.f32.mrb[0].mxu0
    %416 = vmatprep.mubr.bf16.mxu0 0
    %417 = vmatmul.mubr.bf16.gmra.mrb[0].mxu0 %v279
    %v418 = vpop.f32.mrb[0].mxu0
    %v419 = vadd.f32 %v91, %v418
    %v420 = vpop.f32.mrb[0].mxu0
    %v421 = vpop.f32.mrb[0].mxu0
    %v422 = vadd.f32 %v91, %v421
    %v423 = vpop.f32.mrb[0].mxu0
    %424 = vmatprep.mubr.bf16.mxu0 0
    %425 = vmatmul.mubr.bf16.gmra.mrb[0].mxu0 %v282
    %v426 = vpop.f32.mrb[0].mxu0
    %v427 = vadd.f32 %v91, %v426
    %v428 = vpop.f32.mrb[0].mxu0
    %v429 = vpop.f32.mrb[0].mxu0
    %v430 = vadd.f32 %v91, %v429
    %v431 = vpop.f32.mrb[0].mxu0
    %432 = vmatprep.mubr.bf16.mxu0 0
    %433 = vmatmul.mubr.bf16.gmra.mrb[0].mxu0 %v285
    %v434 = vpop.f32.mrb[0].mxu0
    %v435 = vadd.f32 %v91, %v434
    %v436 = vpop.f32.mrb[0].mxu0
    %v437 = vpop.f32.mrb[0].mxu0
    %v438 = vadd.f32 %v91, %v437
    %v439 = vpop.f32.mrb[0].mxu0
    %440 = vmatprep.mubr.bf16.mxu0 0
    %441 = vmatmul.mubr.bf16.gmra.mrb[0].mxu0 %v288
    %v442 = vpop.f32.mrb[0].mxu0
    %v443 = vadd.f32 %v91, %v442
    %v444 = vpop.f32.mrb[0].mxu0
    %v445 = vpop.f32.mrb[0].mxu0
    %v446 = vadd.f32 %v91, %v445
    %v447 = vpop.f32.mrb[0].mxu0
    %448 = vmatprep.mubr.bf16.mxu0 0
    %449 = vmatmul.mubr.bf16.gmra.mrb[0].mxu0 %v291
    %v450 = vpop.f32.mrb[0].mxu0
    %v451 = vadd.f32 %v91, %v450
    %v452 = vpop.f32.mrb[0].mxu0
    %v453 = vpop.f32.mrb[0].mxu0
    %v454 = vadd.f32 %v91, %v453
    %v455 = vpop.f32.mrb[0].mxu0
    %456 = vmatprep.mubr.bf16.mxu0 0
    %457 = vmatmul.mubr.bf16.gmra.mrb[0].mxu0 %v294
    %v458 = vpop.f32.mrb[0].mxu0
    %v459 = vadd.f32 %v91, %v458
    %v460 = vpop.f32.mrb[0].mxu0
    %v461 = vpop.f32.mrb[0].mxu0
    %v462 = vadd.f32 %v91, %v461
    %v463 = vpop.f32.mrb[0].mxu0
    %464 = vmatprep.mubr.bf16.mxu0 0
    %465 = vmatmul.mubr.bf16.gmra.mrb[0].mxu0 %v297
    %v466 = vpop.f32.mrb[0].mxu0
    %v467 = vadd.f32 %v91, %v466
    %v468 = vpop.f32.mrb[0].mxu0
    %v469 = vpop.f32.mrb[0].mxu0
    %v470 = vadd.f32 %v91, %v469
    %v471 = vpop.f32.mrb[0].mxu0
    %472 = vmatprep.mubr.bf16.mxu0 0
    %473 = vmatmul.mubr.bf16.gmra.mrb[0].mxu0 %v300
    %v474 = vpop.f32.mrb[0].mxu0
    %v475 = vadd.f32 %v91, %v474
    %v476 = vpop.f32.mrb[0].mxu0
    %v477 = vpop.f32.mrb[0].mxu0
    %v478 = vadd.f32 %v91, %v477
    %v479 = vpop.f32.mrb[0].mxu0
    %480 = vmatprep.mubr.bf16.mxu0 0
    %481 = vmatmul.mubr.bf16.gmra.mrb[0].mxu0 %v303
    %v482 = vpop.f32.mrb[0].mxu0
    %v483 = vadd.f32 %v91, %v482
    %v484 = vpop.f32.mrb[0].mxu0
    %v485 = vpop.f32.mrb[0].mxu0
    %v486 = vadd.f32 %v91, %v485
    %v487 = vpop.f32.mrb[0].mxu0
    %488 = vmatprep.mubr.bf16.mxu0 0
    %489 = vmatmul.mubr.bf16.gmra.mrb[0].mxu0 %v306
    %v490 = vpop.f32.mrb[0].mxu0
    %v491 = vadd.f32 %v91, %v490
    %v492 = vpop.f32.mrb[0].mxu0
    %v493 = vpop.f32.mrb[0].mxu0
    %v494 = vadd.f32 %v91, %v493
    %v495 = vpop.f32.mrb[0].mxu0
    %496 = vmatprep.mubr.bf16.mxu0 0
    %497 = vmatmul.mubr.bf16.gmra.mrb[0].mxu0 %v309
    %v498 = vpop.f32.mrb[0].mxu0
    %v499 = vadd.f32 %v91, %v498
    %v500 = vpop.f32.mrb[0].mxu0
    %v501 = vpop.f32.mrb[0].mxu0
    %v502 = vadd.f32 %v91, %v501
    %v503 = vpop.f32.mrb[0].mxu0
    %504 = vmatprep.mubr.bf16.mxu0 0
    %505 = vmatmul.mubr.bf16.gmra.mrb[0].mxu0 %v312
    %v506 = vpop.f32.mrb[0].mxu0
    %v507 = vadd.f32 %v91, %v506
    %v508 = vpop.f32.mrb[0].mxu0
    %v509 = vpop.f32.mrb[0].mxu0
    %v510 = vadd.f32 %v91, %v509
    %v511 = vpop.f32.mrb[0].mxu0
    %512 = vmatprep.mubr.bf16.mxu0 0
    %513 = vmatmul.mubr.bf16.gmra.mrb[0].mxu0 %v315
    %v514 = vpop.f32.mrb[0].mxu0
    %v515 = vadd.f32 %v91, %v514
    %v516 = vpop.f32.mrb[0].mxu0
    %v517 = vpop.f32.mrb[0].mxu0
    %v518 = vadd.f32 %v91, %v517
    %v519 = vpop.f32.mrb[0].mxu0
    %520 = vmatprep.mubr.bf16.mxu0 0
    %521 = vmatmul.mubr.bf16.gmra.mrb[0].mxu0 %v318
    %v522 = vpop.f32.mrb[0].mxu0
    %v523 = vadd.f32 %v91, %v522
    %v524 = vpop.f32.mrb[0].mxu0
    %v525 = vpop.f32.mrb[0].mxu0
    %v526 = vadd.f32 %v91, %v525
    %v527 = vpop.f32.mrb[0].mxu0
    %528 = vmatprep.mubr.bf16.mxu0 0
    %529 = vmatmul.mubr.bf16.gmra.mrb[0].mxu0 %v321
    %v530 = vpop.f32.mrb[0].mxu0
    %v531 = vadd.f32 %v91, %v530
    %v532 = vpop.f32.mrb[0].mxu0
    %v533 = vpop.f32.mrb[0].mxu0
    %v534 = vadd.f32 %v91, %v533
    %v535 = vpop.f32.mrb[0].mxu0
    %536 = vmatprep.mubr.bf16.mxu0 0
    %537 = vmatmul.mubr.bf16.gmra.mrb[0].mxu0 %v324
    %v538 = vpop.f32.mrb[0].mxu0
    %v539 = vadd.f32 %v91, %v538
    %v540 = vpop.f32.mrb[0].mxu0
    %v541 = vpop.f32.mrb[0].mxu0
    %v542 = vadd.f32 %v91, %v541
    %v543 = vpop.f32.mrb[0].mxu0
    %544 = vmatprep.mubr.bf16.mxu0 0
    %545 = vmatmul.mubr.bf16.gmra.mrb[0].mxu0 %v327
    %v546 = vpop.f32.mrb[0].mxu0
    %v547 = vadd.f32 %v91, %v546
    %v548 = vpop.f32.mrb[0].mxu0
    %v549 = vpop.f32.mrb[0].mxu0
    %v550 = vadd.f32 %v91, %v549
    %v551 = vpop.f32.mrb[0].mxu0
    %552 = vmatprep.mubr.bf16.mxu0 0
    %553 = vmatmul.mubr.bf16.gmra.mrb[0].mxu0 %v330
    %v554 = vpop.f32.mrb[0].mxu0
    %v555 = vadd.f32 %v91, %v554
    %v556 = vpop.f32.mrb[0].mxu0
    %v557 = vpop.f32.mrb[0].mxu0
    %v558 = vadd.f32 %v91, %v557
    %v559 = vpop.f32.mrb[0].mxu0
    %560 = vmatprep.mubr.bf16.mxu0 0
    %561 = vmatmul.mubr.bf16.gmra.mrb[0].mxu0 %v333
    %v562 = vpop.f32.mrb[0].mxu0
    %v563 = vadd.f32 %v91, %v562
    %v564 = vpop.f32.mrb[0].mxu0
    %v565 = vpop.f32.mrb[0].mxu0
    %v566 = vadd.f32 %v91, %v565
    %v567 = vpop.f32.mrb[0].mxu0
    %568 = vmatprep.mubr.bf16.mxu0 0
    %569 = vmatmul.mubr.bf16.gmra.mrb[0].mxu0 %v336
    %v570 = vpop.f32.mrb[0].mxu0
    %v571 = vadd.f32 %v91, %v570
    %v572 = vpop.f32.mrb[0].mxu0
    %v573 = vpop.f32.mrb[0].mxu0
    %v574 = vadd.f32 %v91, %v573
    %v575 = vpop.f32.mrb[0].mxu0
    %576 = vmatprep.mubr.bf16.mxu0 0
    %577 = vmatmul.mubr.bf16.gmra.mrb[0].mxu0 %v339
    %v578 = vpop.f32.mrb[0].mxu0
    %v579 = vadd.f32 %v91, %v578
    %v580 = vpop.f32.mrb[0].mxu0
    %v581 = vpop.f32.mrb[0].mxu0
    %v582 = vadd.f32 %v91, %v581
    %v583 = vpop.f32.mrb[0].mxu0
    %584 = vmatprep.mubr.bf16.mxu0 0
    %585 = vmatmul.mubr.bf16.gmra.mrb[0].mxu0 %v342
    %v586 = vpop.f32.mrb[0].mxu0
    %v587 = vadd.f32 %v91, %v586
    %v588 = vpop.f32.mrb[0].mxu0
    %v589 = vpop.f32.mrb[0].mxu0
    %v590 = vadd.f32 %v91, %v589
    %v591 = vpop.f32.mrb[0].mxu0
    %592 = vmatprep.mubr.bf16.mxu0 0
    %593 = vmatmul.mubr.bf16.gmra.mrb[0].mxu0 %v345
    %v594 = vpop.f32.mrb[0].mxu0
    %v595 = vadd.f32 %v91, %v594
    %v596 = vpop.f32.mrb[0].mxu0
    %v597 = vpop.f32.mrb[0].mxu0
    %v598 = vadd.f32 %v91, %v597
    %v599 = vpop.f32.mrb[0].mxu0
    %600 = vmatprep.mubr.bf16.mxu0 0
    %601 = vmatmul.mubr.bf16.gmra.mrb[0].mxu0 %v348
    %v602 = vpop.f32.mrb[0].mxu0
    %v603 = vadd.f32 %v91, %v602
    %v604 = vpop.f32.mrb[0].mxu0
    %v605 = vpop.f32.mrb[0].mxu0
    %v606 = vadd.f32 %v91, %v605
    %v607 = vpop.f32.mrb[0].mxu0
    %608 = vmatprep.mubr.bf16.mxu0 0
    %609 = vmatmul.mubr.bf16.gmra.mrb[0].mxu0 %v351
    %v610 = vpop.f32.mrb[0].mxu0
    %v611 = vadd.f32 %v91, %v610
    %v612 = vpop.f32.mrb[0].mxu0
    %v613 = vpop.f32.mrb[0].mxu0
    %v614 = vadd.f32 %v91, %v613
    %v615 = vpop.f32.mrb[0].mxu0
    %616 = vmatprep.mubr.bf16.mxu0 0
    %617 = vmatmul.mubr.bf16.gmra.mrb[0].mxu0 %v354
    %v618 = vpop.f32.mrb[0].mxu0
    %v619 = vadd.f32 %v91, %v618
    %v620 = vpop.f32.mrb[0].mxu0
    %v621 = vpop.f32.mrb[0].mxu0
    %v622 = vadd.f32 %v91, %v621
    %v623 = vpop.f32.mrb[0].mxu0
    %624 = vmatprep.mubr.bf16.mxu0 0
    %625 = vmatmul.mubr.bf16.gmra.mrb[0].mxu0 %v357
    %v626 = vpop.f32.mrb[0].mxu0
    %v627 = vadd.f32 %v91, %v626
    %v628 = vpop.f32.mrb[0].mxu0
    %v629 = vpop.f32.mrb[0].mxu0
    %v630 = vadd.f32 %v91, %v629
    %v631 = vpop.f32.mrb[0].mxu0
    %632 = vmatprep.mubr.bf16.mxu0 0
    %633 = vmatmul.mubr.bf16.gmra.mrb[0].mxu0 %v360
    %v634 = vpop.f32.mrb[0].mxu0
    %v635 = vadd.f32 %v91, %v634
    %v636 = vpop.f32.mrb[0].mxu0
    %v637 = vpop.f32.mrb[0].mxu0
    %v638 = vadd.f32 %v91, %v637
    %v639 = vpop.f32.mrb[0].mxu0
    %640 = vmatprep.mubr.bf16.mxu0 0
    %641 = vmatmul.mubr.bf16.gmra.mrb[0].mxu0 %v363
    %v642 = vpop.f32.mrb[0].mxu0
    %v643 = vadd.f32 %v91, %v642
    %v644 = vpop.f32.mrb[0].mxu0
    %v645 = vpop.f32.mrb[0].mxu0
    %v646 = vadd.f32 %v91, %v645
    %v647 = vpop.f32.mrb[0].mxu0
    %648 = vmatprep.mubr.bf16.mxu0 0
    %649 = vmatmul.mubr.bf16.gmra.mrb[0].mxu0 %v366
    %v650 = vpop.f32.mrb[0].mxu0
    %v651 = vadd.f32 %v91, %v650
    %v652 = vpop.f32.mrb[0].mxu0
    %v653 = vpop.f32.mrb[0].mxu0
    %v654 = vadd.f32 %v91, %v653
    %v655 = vpop.f32.mrb[0].mxu0
    %656 = vdwg.mxu0
    %vm657 = vcmp.ge.f32.partialorder %v403, 0.0
    %vm658 = vcmp.ge.f32.partialorder %v406, 0.0
    %vm659 = vcmp.ge.f32.partialorder %v411, 0.0
    %vm660 = vcmp.ge.f32.partialorder %v414, 0.0
    %vm661 = vcmp.ge.f32.partialorder %v419, 0.0
    %vm662 = vcmp.ge.f32.partialorder %v422, 0.0
    %vm663 = vcmp.ge.f32.partialorder %v427, 0.0
    %vm664 = vcmp.ge.f32.partialorder %v430, 0.0
    %vm665 = vcmp.ge.f32.partialorder %v435, 0.0
    %vm666 = vcmp.ge.f32.partialorder %v438, 0.0
    %vm667 = vcmp.ge.f32.partialorder %v443, 0.0
    %vm668 = vcmp.ge.f32.partialorder %v446, 0.0
    %vm669 = vcmp.ge.f32.partialorder %v451, 0.0
    %vm670 = vcmp.ge.f32.partialorder %v454, 0.0
    %vm671 = vcmp.ge.f32.partialorder %v459, 0.0
    %vm672 = vcmp.ge.f32.partialorder %v462, 0.0
    %vm673 = vcmp.ge.f32.partialorder %v467, 0.0
    %vm674 = vcmp.ge.f32.partialorder %v470, 0.0
    %vm675 = vcmp.ge.f32.partialorder %v475, 0.0
    %vm676 = vcmp.ge.f32.partialorder %v478, 0.0
    %vm677 = vcmp.ge.f32.partialorder %v483, 0.0
    %vm678 = vcmp.ge.f32.partialorder %v486, 0.0
    %vm679 = vcmp.ge.f32.partialorder %v491, 0.0
    %vm680 = vcmp.ge.f32.partialorder %v494, 0.0
    %vm681 = vcmp.ge.f32.partialorder %v499, 0.0
    %vm682 = vcmp.ge.f32.partialorder %v502, 0.0
    %vm683 = vcmp.ge.f32.partialorder %v507, 0.0
    %vm684 = vcmp.ge.f32.partialorder %v510, 0.0
    %vm685 = vcmp.ge.f32.partialorder %v515, 0.0
    %vm686 = vcmp.ge.f32.partialorder %v518, 0.0
    %vm687 = vcmp.ge.f32.partialorder %v523, 0.0
    %vm688 = vcmp.ge.f32.partialorder %v526, 0.0
    %vm689 = vcmp.ge.f32.partialorder %v531, 0.0
    %vm690 = vcmp.ge.f32.partialorder %v534, 0.0
    %vm691 = vcmp.ge.f32.partialorder %v539, 0.0
    %vm692 = vcmp.ge.f32.partialorder %v542, 0.0
    %vm693 = vcmp.ge.f32.partialorder %v547, 0.0
    %vm694 = vcmp.ge.f32.partialorder %v550, 0.0
    %vm695 = vcmp.ge.f32.partialorder %v555, 0.0
    %vm696 = vcmp.ge.f32.partialorder %v558, 0.0
    %vm697 = vcmp.ge.f32.partialorder %v563, 0.0
    %vm698 = vcmp.ge.f32.partialorder %v566, 0.0
    %vm699 = vcmp.ge.f32.partialorder %v571, 0.0
    %vm700 = vcmp.ge.f32.partialorder %v574, 0.0
    %vm701 = vcmp.ge.f32.partialorder %v579, 0.0
    %vm702 = vcmp.ge.f32.partialorder %v582, 0.0
    %vm703 = vcmp.ge.f32.partialorder %v587, 0.0
    %vm704 = vcmp.ge.f32.partialorder %v590, 0.0
    %vm705 = vcmp.ge.f32.partialorder %v595, 0.0
    %vm706 = vcmp.ge.f32.partialorder %v598, 0.0
    %vm707 = vcmp.ge.f32.partialorder %v603, 0.0
    %vm708 = vcmp.ge.f32.partialorder %v606, 0.0
    %vm709 = vcmp.ge.f32.partialorder %v611, 0.0
    %vm710 = vcmp.ge.f32.partialorder %v614, 0.0
    %vm711 = vcmp.ge.f32.partialorder %v619, 0.0
    %vm712 = vcmp.ge.f32.partialorder %v622, 0.0
    %vm713 = vcmp.ge.f32.partialorder %v627, 0.0
    %vm714 = vcmp.ge.f32.partialorder %v630, 0.0
    %vm715 = vcmp.ge.f32.partialorder %v635, 0.0
    %vm716 = vcmp.ge.f32.partialorder %v638, 0.0
    %vm717 = vcmp.ge.f32.partialorder %v643, 0.0
    %vm718 = vcmp.ge.f32.partialorder %v646, 0.0
    %vm719 = vcmp.ge.f32.partialorder %v651, 0.0
    %vm720 = vcmp.ge.f32.partialorder %v654, 0.0
    %v721 = vmul.f32 %v403, 0.2
    %v722 = vmul.f32 %v406, 0.2
    %v723 = vmul.f32 %v411, 0.2
    %v724 = vmul.f32 %v414, 0.2
    %v725 = vmul.f32 %v419, 0.2
    %v726 = vmul.f32 %v422, 0.2
    %v727 = vmul.f32 %v427, 0.2
    %v728 = vmul.f32 %v430, 0.2
    %v729 = vmul.f32 %v435, 0.2
    %v730 = vmul.f32 %v438, 0.2
    %v731 = vmul.f32 %v443, 0.2
    %v732 = vmul.f32 %v446, 0.2
    %v733 = vmul.f32 %v451, 0.2
    %v734 = vmul.f32 %v454, 0.2
    %v735 = vmul.f32 %v459, 0.2
    %v736 = vmul.f32 %v462, 0.2
    %v737 = vmul.f32 %v467, 0.2
    %v738 = vmul.f32 %v470, 0.2
    %v739 = vmul.f32 %v475, 0.2
    %v740 = vmul.f32 %v478, 0.2
    %v741 = vmul.f32 %v483, 0.2
    %v742 = vmul.f32 %v486, 0.2
    %v743 = vmul.f32 %v491, 0.2
    %v744 = vmul.f32 %v494, 0.2
    %v745 = vmul.f32 %v499, 0.2
    %v746 = vmul.f32 %v502, 0.2
    %v747 = vmul.f32 %v507, 0.2
    %v748 = vmul.f32 %v510, 0.2
    %v749 = vmul.f32 %v515, 0.2
    %v750 = vmul.f32 %v518, 0.2
    %v751 = vmul.f32 %v523, 0.2
    %v752 = vmul.f32 %v526, 0.2
    %v753 = vmul.f32 %v531, 0.2
    %v754 = vmul.f32 %v534, 0.2
    %v755 = vmul.f32 %v539, 0.2
    %v756 = vmul.f32 %v542, 0.2
    %v757 = vmul.f32 %v547, 0.2
    %v758 = vmul.f32 %v550, 0.2
    %v759 = vmul.f32 %v555, 0.2
    %v760 = vmul.f32 %v558, 0.2
    %v761 = vmul.f32 %v563, 0.2
    %v762 = vmul.f32 %v566, 0.2
    %v763 = vmul.f32 %v571, 0.2
    %v764 = vmul.f32 %v574, 0.2
    %v765 = vmul.f32 %v579, 0.2
    %v766 = vmul.f32 %v582, 0.2
    %v767 = vmul.f32 %v587, 0.2
    %v768 = vmul.f32 %v590, 0.2
    %v769 = vmul.f32 %v595, 0.2
    %v770 = vmul.f32 %v598, 0.2
    %v771 = vmul.f32 %v603, 0.2
    %v772 = vmul.f32 %v606, 0.2
    %v773 = vmul.f32 %v611, 0.2
    %v774 = vmul.f32 %v614, 0.2
    %v775 = vmul.f32 %v619, 0.2
    %v776 = vmul.f32 %v622, 0.2
    %v777 = vmul.f32 %v627, 0.2
    %v778 = vmul.f32 %v630, 0.2
    %v779 = vmul.f32 %v635, 0.2
    %v780 = vmul.f32 %v638, 0.2
    %v781 = vmul.f32 %v643, 0.2
    %v782 = vmul.f32 %v646, 0.2
    %v783 = vmul.f32 %v651, 0.2
    %v784 = vmul.f32 %v654, 0.2
    %v785 = vsel %vm657, %v403, %v721
    %v786 = vsel %vm658, %v406, %v722
    %v787 = vsel %vm659, %v411, %v723
    %v788 = vsel %vm660, %v414, %v724
    %v789 = vsel %vm661, %v419, %v725
    %v790 = vsel %vm662, %v422, %v726
    %v791 = vsel %vm663, %v427, %v727
    %v792 = vsel %vm664, %v430, %v728
    %v793 = vsel %vm665, %v435, %v729
    %v794 = vsel %vm666, %v438, %v730
    %v795 = vsel %vm667, %v443, %v731
    %v796 = vsel %vm668, %v446, %v732
    %v797 = vsel %vm669, %v451, %v733
    %v798 = vsel %vm670, %v454, %v734
    %v799 = vsel %vm671, %v459, %v735
    %v800 = vsel %vm672, %v462, %v736
    %v801 = vsel %vm673, %v467, %v737
    %v802 = vsel %vm674, %v470, %v738
    %v803 = vsel %vm675, %v475, %v739
    %v804 = vsel %vm676, %v478, %v740
    %v805 = vsel %vm677, %v483, %v741
    %v806 = vsel %vm678, %v486, %v742
    %v807 = vsel %vm679, %v491, %v743
    %v808 = vsel %vm680, %v494, %v744
    %v809 = vsel %vm681, %v499, %v745
    %v810 = vsel %vm682, %v502, %v746
    %v811 = vsel %vm683, %v507, %v747
    %v812 = vsel %vm684, %v510, %v748
    %v813 = vsel %vm685, %v515, %v749
    %v814 = vsel %vm686, %v518, %v750
    %v815 = vsel %vm687, %v523, %v751
    %v816 = vsel %vm688, %v526, %v752
    %v817 = vsel %vm689, %v531, %v753
    %v818 = vsel %vm690, %v534, %v754
    %v819 = vsel %vm691, %v539, %v755
    %v820 = vsel %vm692, %v542, %v756
    %v821 = vsel %vm693, %v547, %v757
    %v822 = vsel %vm694, %v550, %v758
    %v823 = vsel %vm695, %v555, %v759
    %v824 = vsel %vm696, %v558, %v760
    %v825 = vsel %vm697, %v563, %v761
    %v826 = vsel %vm698, %v566, %v762
    %v827 = vsel %vm699, %v571, %v763
    %v828 = vsel %vm700, %v574, %v764
    %v829 = vsel %vm701, %v579, %v765
    %v830 = vsel %vm702, %v582, %v766
    %v831 = vsel %vm703, %v587, %v767
    %v832 = vsel %vm704, %v590, %v768
    %v833 = vsel %vm705, %v595, %v769
    %v834 = vsel %vm706, %v598, %v770
    %v835 = vsel %vm707, %v603, %v771
    %v836 = vsel %vm708, %v606, %v772
    %v837 = vsel %vm709, %v611, %v773
    %v838 = vsel %vm710, %v614, %v774
    %v839 = vsel %vm711, %v619, %v775
    %v840 = vsel %vm712, %v622, %v776
    %v841 = vsel %vm713, %v627, %v777
    %v842 = vsel %vm714, %v630, %v778
    %v843 = vsel %vm715, %v635, %v779
    %v844 = vsel %vm716, %v638, %v780
    %v845 = vsel %vm717, %v643, %v781
    %v846 = vsel %vm718, %v646, %v782
    %v847 = vsel %vm719, %v651, %v783
    %v848 = vsel %vm720, %v654, %v784
    %v849 = vpack.c.bf16 %v786, %v785
    %v850 = vpack.c.bf16 %v788, %v787
    %v851 = vpack.c.bf16 %v790, %v789
    %v852 = vpack.c.bf16 %v792, %v791
    %v853 = vpack.c.bf16 %v794, %v793
    %v854 = vpack.c.bf16 %v796, %v795
    %v855 = vpack.c.bf16 %v798, %v797
    %v856 = vpack.c.bf16 %v800, %v799
    %v857 = vpack.c.bf16 %v802, %v801
    %v858 = vpack.c.bf16 %v804, %v803
    %v859 = vpack.c.bf16 %v806, %v805
    %v860 = vpack.c.bf16 %v808, %v807
    %v861 = vpack.c.bf16 %v810, %v809
    %v862 = vpack.c.bf16 %v812, %v811
    %v863 = vpack.c.bf16 %v814, %v813
    %v864 = vpack.c.bf16 %v816, %v815
    %v865 = vpack.c.bf16 %v818, %v817
    %v866 = vpack.c.bf16 %v820, %v819
    %v867 = vpack.c.bf16 %v822, %v821
    %v868 = vpack.c.bf16 %v824, %v823
    %v869 = vpack.c.bf16 %v826, %v825
    %v870 = vpack.c.bf16 %v828, %v827
    %v871 = vpack.c.bf16 %v830, %v829
    %v872 = vpack.c.bf16 %v832, %v831
    %v873 = vpack.c.bf16 %v834, %v833
    %v874 = vpack.c.bf16 %v836, %v835
    %v875 = vpack.c.bf16 %v838, %v837
    %v876 = vpack.c.bf16 %v840, %v839
    %v877 = vpack.c.bf16 %v842, %v841
    %v878 = vpack.c.bf16 %v844, %v843
    %v879 = vpack.c.bf16 %v846, %v845
    %v880 = vpack.c.bf16 %v848, %v847
    %v913 = vunpack.c.l.b16 %v849
    %v914 = vunpack.c.h.b16 %v849
    %v915 = vunpack.c.l.b16 %v850
    %v916 = vunpack.c.h.b16 %v850
    %v917 = vunpack.c.l.b16 %v851
    %v918 = vunpack.c.h.b16 %v851
    %v919 = vunpack.c.l.b16 %v852
    %v920 = vunpack.c.h.b16 %v852
    %v921 = vunpack.c.l.b16 %v853
    %v922 = vunpack.c.h.b16 %v853
    %v923 = vunpack.c.l.b16 %v854
    %v924 = vunpack.c.h.b16 %v854
    %v925 = vunpack.c.l.b16 %v855
    %v926 = vunpack.c.h.b16 %v855
    %v927 = vunpack.c.l.b16 %v856
    %v928 = vunpack.c.h.b16 %v856
    %v929 = vunpack.c.l.b16 %v857
    %v930 = vunpack.c.h.b16 %v857
    %v931 = vunpack.c.l.b16 %v858
    %v932 = vunpack.c.h.b16 %v858
    %v933 = vunpack.c.l.b16 %v859
    %v934 = vunpack.c.h.b16 %v859
    %v935 = vunpack.c.l.b16 %v860
    %v936 = vunpack.c.h.b16 %v860
    %v937 = vunpack.c.l.b16 %v861
    %v938 = vunpack.c.h.b16 %v861
    %v939 = vunpack.c.l.b16 %v862
    %v940 = vunpack.c.h.b16 %v862
    %v941 = vunpack.c.l.b16 %v863
    %v942 = vunpack.c.h.b16 %v863
    %v943 = vunpack.c.l.b16 %v864
    %v944 = vunpack.c.h.b16 %v864
    %v945 = vunpack.c.l.b16 %v865
    %v946 = vunpack.c.h.b16 %v865
    %v947 = vunpack.c.l.b16 %v866
    %v948 = vunpack.c.h.b16 %v866
    %v949 = vunpack.c.l.b16 %v867
    %v950 = vunpack.c.h.b16 %v867
    %v951 = vunpack.c.l.b16 %v868
    %v952 = vunpack.c.h.b16 %v868
    %v953 = vunpack.c.l.b16 %v869
    %v954 = vunpack.c.h.b16 %v869
    %v955 = vunpack.c.l.b16 %v870
    %v956 = vunpack.c.h.b16 %v870
    %v957 = vunpack.c.l.b16 %v871
    %v958 = vunpack.c.h.b16 %v871
    %v959 = vunpack.c.l.b16 %v872
    %v960 = vunpack.c.h.b16 %v872
    %v961 = vunpack.c.l.b16 %v873
    %v962 = vunpack.c.h.b16 %v873
    %v963 = vunpack.c.l.b16 %v874
    %v964 = vunpack.c.h.b16 %v874
    %v965 = vunpack.c.l.b16 %v875
    %v966 = vunpack.c.h.b16 %v875
    %v967 = vunpack.c.l.b16 %v876
    %v968 = vunpack.c.h.b16 %v876
    %v969 = vunpack.c.l.b16 %v877
    %v970 = vunpack.c.h.b16 %v877
    %v971 = vunpack.c.l.b16 %v878
    %v972 = vunpack.c.h.b16 %v878
    %v973 = vunpack.c.l.b16 %v879
    %v974 = vunpack.c.h.b16 %v879
    %v975 = vunpack.c.l.b16 %v880
    %v976 = vunpack.c.h.b16 %v880
    %v977 = vpack.c.b16 %v913, %v913
    %v978 = vpack.c.b16 %v914, %v914
    %v979 = vpack.c.b16 %v915, %v915
    %v980 = vpack.c.b16 %v916, %v916
    %v981 = vpack.c.b16 %v917, %v917
    %v982 = vpack.c.b16 %v918, %v918
    %v983 = vpack.c.b16 %v919, %v919
    %v984 = vpack.c.b16 %v920, %v920
    %v985 = vpack.c.b16 %v921, %v921
    %v986 = vpack.c.b16 %v922, %v922
    %v987 = vpack.c.b16 %v923, %v923
    %v988 = vpack.c.b16 %v924, %v924
    %v989 = vpack.c.b16 %v925, %v925
    %v990 = vpack.c.b16 %v926, %v926
    %v991 = vpack.c.b16 %v927, %v927
    %v992 = vpack.c.b16 %v928, %v928
    %v993 = vpack.c.b16 %v929, %v929
    %v994 = vpack.c.b16 %v930, %v930
    %v995 = vpack.c.b16 %v931, %v931
    %v996 = vpack.c.b16 %v932, %v932
    %v997 = vpack.c.b16 %v933, %v933
    %v998 = vpack.c.b16 %v934, %v934
    %v999 = vpack.c.b16 %v935, %v935
    %v1000 = vpack.c.b16 %v936, %v936
    %v1001 = vpack.c.b16 %v937, %v937
    %v1002 = vpack.c.b16 %v938, %v938
    %v1003 = vpack.c.b16 %v939, %v939
    %v1004 = vpack.c.b16 %v940, %v940
    %v1005 = vpack.c.b16 %v941, %v941
    %v1006 = vpack.c.b16 %v942, %v942
    %v1007 = vpack.c.b16 %v943, %v943
    %v1008 = vpack.c.b16 %v944, %v944
    %v1009 = vpack.c.b16 %v945, %v945
    %v1010 = vpack.c.b16 %v946, %v946
    %v1011 = vpack.c.b16 %v947, %v947
    %v1012 = vpack.c.b16 %v948, %v948
    %v1013 = vpack.c.b16 %v949, %v949
    %v1014 = vpack.c.b16 %v950, %v950
    %v1015 = vpack.c.b16 %v951, %v951
    %v1016 = vpack.c.b16 %v952, %v952
    %v1017 = vpack.c.b16 %v953, %v953
    %v1018 = vpack.c.b16 %v954, %v954
    %v1019 = vpack.c.b16 %v955, %v955
    %v1020 = vpack.c.b16 %v956, %v956
    %v1021 = vpack.c.b16 %v957, %v957
    %v1022 = vpack.c.b16 %v958, %v958
    %v1023 = vpack.c.b16 %v959, %v959
    %v1024 = vpack.c.b16 %v960, %v960
    %v1025 = vpack.c.b16 %v961, %v961
    %v1026 = vpack.c.b16 %v962, %v962
    %v1027 = vpack.c.b16 %v963, %v963
    %v1028 = vpack.c.b16 %v964, %v964
    %v1029 = vpack.c.b16 %v965, %v965
    %v1030 = vpack.c.b16 %v966, %v966
    %v1031 = vpack.c.b16 %v967, %v967
    %v1032 = vpack.c.b16 %v968, %v968
    %v1033 = vpack.c.b16 %v969, %v969
    %v1034 = vpack.c.b16 %v970, %v970
    %v1035 = vpack.c.b16 %v971, %v971
    %v1036 = vpack.c.b16 %v972, %v972
    %v1037 = vpack.c.b16 %v973, %v973
    %v1038 = vpack.c.b16 %v974, %v974
    %v1039 = vpack.c.b16 %v975, %v975
    %v1040 = vpack.c.b16 %v976, %v976
    %1105 = vst [vmem:[#allocation2] sm:$0xf] %v977
    %1106 = vst [vmem:[#allocation2 + $0x4] sm:$0xf] %v978
    %1107 = vst [vmem:[#allocation2 + $0x8] sm:$0xf] %v979
    %1108 = vst [vmem:[#allocation2 + $0xc] sm:$0xf] %v980
    %1109 = vst [vmem:[#allocation2 + $0x10] sm:$0xf] %v981
    %1110 = vst [vmem:[#allocation2 + $0x14] sm:$0xf] %v982
    %1111 = vst [vmem:[#allocation2 + $0x18] sm:$0xf] %v983
    %1112 = vst [vmem:[#allocation2 + $0x1c] sm:$0xf] %v984
    %1113 = vst [vmem:[#allocation2 + $0x20] sm:$0xf] %v985
    %1114 = vst [vmem:[#allocation2 + $0x24] sm:$0xf] %v986
    %1115 = vst [vmem:[#allocation2 + $0x28] sm:$0xf] %v987
    %1116 = vst [vmem:[#allocation2 + $0x2c] sm:$0xf] %v988
    %1117 = vst [vmem:[#allocation2 + $0x30] sm:$0xf] %v989
    %1118 = vst [vmem:[#allocation2 + $0x34] sm:$0xf] %v990
    %1119 = vst [vmem:[#allocation2 + $0x38] sm:$0xf] %v991
    %1120 = vst [vmem:[#allocation2 + $0x3c] sm:$0xf] %v992
    %1121 = vst [vmem:[#allocation2 + $0x40] sm:$0xf] %v993
    %1122 = vst [vmem:[#allocation2 + $0x44] sm:$0xf] %v994
    %1123 = vst [vmem:[#allocation2 + $0x48] sm:$0xf] %v995
    %1124 = vst [vmem:[#allocation2 + $0x4c] sm:$0xf] %v996
    %1125 = vst [vmem:[#allocation2 + $0x50] sm:$0xf] %v997
    %1126 = vst [vmem:[#allocation2 + $0x54] sm:$0xf] %v998
    %1127 = vst [vmem:[#allocation2 + $0x58] sm:$0xf] %v999
    %1128 = vst [vmem:[#allocation2 + $0x5c] sm:$0xf] %v1000
    %1129 = vst [vmem:[#allocation2 + $0x60] sm:$0xf] %v1001
    %1130 = vst [vmem:[#allocation2 + $0x64] sm:$0xf] %v1002
    %1131 = vst [vmem:[#allocation2 + $0x68] sm:$0xf] %v1003
    %1132 = vst [vmem:[#allocation2 + $0x6c] sm:$0xf] %v1004
    %1133 = vst [vmem:[#allocation2 + $0x70] sm:$0xf] %v1005
    %1134 = vst [vmem:[#allocation2 + $0x74] sm:$0xf] %v1006
    %1135 = vst [vmem:[#allocation2 + $0x78] sm:$0xf] %v1007
    %1136 = vst [vmem:[#allocation2 + $0x7c] sm:$0xf] %v1008
    %1137 = vst [vmem:[#allocation2 + $0x80] sm:$0xf] %v1009
    %1138 = vst [vmem:[#allocation2 + $0x84] sm:$0xf] %v1010
    %1139 = vst [vmem:[#allocation2 + $0x88] sm:$0xf] %v1011
    %1140 = vst [vmem:[#allocation2 + $0x8c] sm:$0xf] %v1012
    %1141 = vst [vmem:[#allocation2 + $0x90] sm:$0xf] %v1013
    %1142 = vst [vmem:[#allocation2 + $0x94] sm:$0xf] %v1014
    %1143 = vst [vmem:[#allocation2 + $0x98] sm:$0xf] %v1015
    %1144 = vst [vmem:[#allocation2 + $0x9c] sm:$0xf] %v1016
    %1145 = vst [vmem:[#allocation2 + $0xa0] sm:$0xf] %v1017
    %1146 = vst [vmem:[#allocation2 + $0xa4] sm:$0xf] %v1018
    %1147 = vst [vmem:[#allocation2 + $0xa8] sm:$0xf] %v1019
    %1148 = vst [vmem:[#allocation2 + $0xac] sm:$0xf] %v1020
    %1149 = vst [vmem:[#allocation2 + $0xb0] sm:$0xf] %v1021
    %1150 = vst [vmem:[#allocation2 + $0xb4] sm:$0xf] %v1022
    %1151 = vst [vmem:[#allocation2 + $0xb8] sm:$0xf] %v1023
    %1152 = vst [vmem:[#allocation2 + $0xbc] sm:$0xf] %v1024
    %1153 = vst [vmem:[#allocation2 + $0xc0] sm:$0xf] %v1025
    %1154 = vst [vmem:[#allocation2 + $0xc4] sm:$0xf] %v1026
    %1155 = vst [vmem:[#allocation2 + $0xc8] sm:$0xf] %v1027
    %1156 = vst [vmem:[#allocation2 + $0xcc] sm:$0xf] %v1028
    %1157 = vst [vmem:[#allocation2 + $0xd0] sm:$0xf] %v1029
    %1158 = vst [vmem:[#allocation2 + $0xd4] sm:$0xf] %v1030
    %1159 = vst [vmem:[#allocation2 + $0xd8] sm:$0xf] %v1031
    %1160 = vst [vmem:[#allocation2 + $0xdc] sm:$0xf] %v1032
    %1161 = vst [vmem:[#allocation2 + $0xe0] sm:$0xf] %v1033
    %1162 = vst [vmem:[#allocation2 + $0xe4] sm:$0xf] %v1034
    %1163 = vst [vmem:[#allocation2 + $0xe8] sm:$0xf] %v1035
    %1164 = vst [vmem:[#allocation2 + $0xec] sm:$0xf] %v1036
    %1165 = vst [vmem:[#allocation2 + $0xf0] sm:$0xf] %v1037
    %1166 = vst [vmem:[#allocation2 + $0xf4] sm:$0xf] %v1038
    %1167 = vst [vmem:[#allocation2 + $0xf8] sm:$0xf] %v1039
    %1168 = vst [vmem:[#allocation2 + $0xfc] sm:$0xf] %v1040
    // Predicated region
    $region14: #{tpu_custom_call.1} parent=1 // pred_check
      _
    $region15: #{tpu_custom_call.1} parent=1 // pred_check_branch
      %1170 = sbr.rel (0) target = $region17
    $region16: #{tpu_custom_call.1} parent=1 // pred_region
      %s1172 = ssub.s32 4096, 4096
      %1173 = vsyncadd [#allocation3], %s1172
      %s1174 = sshll.u32 [#allocation2], 4
      %s1175 = int_to_ptr.vmem [resolvable:$true] %s1174
      %1180 = dma.vmem_to_hbm [thread:$0]  %s1175, 4096, %s3, [#allocation3], 64, 64, 4
    $region17: #{tpu_custom_call.1} parent=1 // pred_fallthru
      _
    // Predicated region
    $region18: #{tpu_custom_call.1} parent=1 // pred_check
      _
    $region19: #{tpu_custom_call.1} parent=1 // pred_check_branch
      %1182 = sbr.rel (0) target = $region21
    $region20: #{tpu_custom_call.1} parent=1 // pred_region
      %1183 = dma.done [#allocation3], 4096
    $region21: #{tpu_custom_call.1} parent=1 // pred_fallthru
      _
    %1184 = vsyncpa [#allocation3], 1

</llo_original>
